<compile_context>
chip_gen: v7x
topology: tpu7x:2x2x1
jax: 0.10.0
libtpu: 0.0.40
codegen_flags: <defaults>
</compile_context>

<pallas_src>
import functools
import math

import jax
import jax.numpy as jnp
from jax.experimental import pallas as pl
from jax.experimental.pallas import tpu as pltpu


def _ls_ce_kernel(x_ref, t_ref, out_ref, *, smoothing, confidence, n_rows):
    x = x_ref[...].astype(jnp.float32)                                   # (TM, C)
    t = t_ref[...]                                                       # (TM, 1) int32
    tm, c = x.shape

    # log-sum-exp pieces (no full logprobs tile materialized)
    m = jnp.max(x, axis=-1, keepdims=True)                               # (TM, 1)
    lse = jnp.log(jnp.sum(jnp.exp(x - m), axis=-1, keepdims=True))       # (TM, 1)

    # Fused weighted reduction: corr = confidence*x[target] + (smoothing/C)*sum(x)
    # computed as one cross-lane reduce (VPU has slack; XLU is the scarcer unit).
    col = jax.lax.broadcasted_iota(jnp.int32, (1, c), 1)                 # (1, C)
    w = (smoothing / c) + jnp.where(col == t, confidence, 0.0)           # (TM, C)
    corr = jnp.sum(w * x, axis=-1, keepdims=True)                        # (TM, 1)

    # per-row loss = (m + lse) - confidence*x_t - (smoothing/C)*sum_x
    loss = (m + lse) - corr                                              # (TM, 1)

    # Mask rows beyond the true N (wrapper pads N up to a block_rows multiple).
    row = pl.program_id(0) * tm + jax.lax.broadcasted_iota(jnp.int32, (tm, 1), 0)
    loss = jnp.where(row < n_rows, loss, 0.0)

    # Lane-dense (1, 128) store of this block's partial sum (value in lane 0).
    block_sum = jnp.sum(loss)
    lane = jax.lax.broadcasted_iota(jnp.int32, (1, 128), 1)
    out_ref[...] = jnp.where(lane == 0, block_sum, 0.0)


def _round_up(a, m):
    return ((a + m - 1) // m) * m


def _vmem_budgets():
    """(max x-block bytes, vmem_limit_bytes) tuned per TPU generation."""
    vmem_cap = 64 * 1024 * 1024  # conservative default (v7x per-TC VMEM)
    try:
        info = pltpu.get_tpu_info()
        vmem_cap = int(getattr(info, "vmem_capacity_bytes", vmem_cap))
    except Exception:
        pass
    if vmem_cap >= 100 * 1024 * 1024:          # v5e / v6e: 128 MiB physical VMEM
        return 20 * 1024 * 1024, 80 * 1024 * 1024
    else:                                      # v7x: 64 MiB per TensorCore
        return 10 * 1024 * 1024, 44 * 1024 * 1024


def _pick_block_rows(n, c, dtype, max_block_bytes, min_blocks=8):
    """Row-block size: sublane-aligned, within the f32-equivalent VMEM budget."""
    itemsize = jnp.dtype(dtype).itemsize
    sublane = {4: 8, 2: 16, 1: 32}.get(itemsize, 8)
    # Budget in f32-equivalent bytes (in-kernel math upcasts to f32 and the live
    # temporaries roughly match the f32 tile); +512 B/row for the lane-padded
    # (TM, 1) int32 targets buffer.
    bytes_per_row = c * 4 + 512
    cap_rows = max(sublane, (max_block_bytes // bytes_per_row) // sublane * sublane)
    # Prefer >= min_blocks grid steps so megacore sharding / pipelining kick in.
    pref_rows = _round_up(max(1, math.ceil(n / min_blocks)), sublane)
    return min(cap_rows, pref_rows)


def label_smoothing_cross_entropy(x, target, smoothing=0.1, block_rows=None):
    """x: (N, C) float logits (f32 or bf16); target: (N,) int labels. Scalar f32 loss."""
    assert smoothing < 1.0
    confidence = 1.0 - smoothing
    n, c = x.shape

    max_block_bytes, vmem_limit = _vmem_budgets()
    if block_rows is None:
        block_rows = _pick_block_rows(n, c, x.dtype, max_block_bytes)

    num_blocks = math.ceil(n / block_rows)
    n_padded = num_blocks * block_rows

    # Pad rows up to a block multiple; padded rows are masked to zero loss in-kernel.
    if n_padded != n:
        x = jnp.pad(x, ((0, n_padded - n), (0, 0)))
        target = jnp.pad(target, (0, n_padded - n))
    t2d = target.astype(jnp.int32).reshape(n_padded, 1)

    # TODO(synk): for vocab-scale C (>=128K) add a class-axis grid dimension
    # ("arbitrary", last) with online max/sum/weighted-sum carries in VMEM scratch
    # so each (block_rows, tile_C) DMA tile stays a few MiB on v7x's 64 MiB VMEM.
    kernel = functools.partial(
        _ls_ce_kernel,
        smoothing=float(smoothing),
        confidence=float(confidence),
        n_rows=int(n),
    )

    itemsize = jnp.dtype(x.dtype).itemsize
    cost = pl.CostEstimate(
        flops=int(6 * n * c),
        transcendentals=int(n * c),
        bytes_accessed=int(n * c * itemsize + n * 4 + num_blocks * 128 * 4),
    )

    partials = pl.pallas_call(
        kernel,
        out_shape=jax.ShapeDtypeStruct((1, num_blocks * 128), jnp.float32),
        grid_spec=pltpu.PrefetchScalarGridSpec(
            num_scalar_prefetch=0,
            grid=(num_blocks,),
            in_specs=[
                pl.BlockSpec((block_rows, c), lambda i: (i, 0)),
                pl.BlockSpec((block_rows, 1), lambda i: (i, 0)),
            ],
            out_specs=pl.BlockSpec((1, 128), lambda i: (0, i)),
        ),
        compiler_params=pltpu.CompilerParams(
            dimension_semantics=("parallel",),   # no cross-step dependency
            vmem_limit_bytes=int(vmem_limit),
        ),
        cost_estimate=cost,
    )(x, t2d)

    return jnp.sum(partials) / jnp.float32(n)


def _reference(x, target, smoothing=0.1):
    logprobs = jax.nn.log_softmax(x.astype(jnp.float32), axis=-1)
    nll = -jnp.take_along_axis(logprobs, target[:, None], axis=-1)[:, 0]
    smooth = -jnp.mean(logprobs, axis=-1)
    return jnp.mean((1.0 - smoothing) * nll + smoothing * smooth)


if __name__ == "__main__":
    key = jax.random.PRNGKey(0)

    # Case 1: f32 logits, even N.
    kx, kt, key = jax.random.split(key, 3)
    N, C = 16, 32
    x = jax.random.normal(kx, (N, C), dtype=jnp.float32)
    target = jax.random.randint(kt, (N,), 0, C, dtype=jnp.int32)
    loss = jax.block_until_ready(label_smoothing_cross_entropy(x, target, smoothing=0.1))
    ref = _reference(x, target, smoothing=0.1)
    assert jnp.allclose(loss, ref, atol=1e-5, rtol=1e-5), (loss, ref)

    # Case 2: bf16 logits, N not a multiple of the block size (exercises padding + mask).
    kx2, kt2 = jax.random.split(key)
    N2, C2 = 13, 40
    x2 = jax.random.normal(kx2, (N2, C2), dtype=jnp.float32).astype(jnp.bfloat16)
    target2 = jax.random.randint(kt2, (N2,), 0, C2, dtype=jnp.int32)
    loss2 = jax.block_until_ready(label_smoothing_cross_entropy(x2, target2, smoothing=0.1))
    ref2 = _reference(x2, target2, smoothing=0.1)
    assert jnp.allclose(loss2, ref2, atol=1e-4, rtol=1e-4), (loss2, ref2)

    print("KERNEL_OK")
</pallas_src>

<mosaic_0001>
module attributes {stable_mosaic.version = 11 : i64} {
  func.func @_ls_ce_kernel(%arg0: i32, %arg1: memref<8x32xf32, #tpu.memory_space<vmem>>, %arg2: memref<8x1xi32, #tpu.memory_space<vmem>>, %arg3: memref<1x128xf32, #tpu.memory_space<vmem>>) attributes {dimension_semantics = [#tpu.dimension_semantics<parallel>], iteration_bounds = array<i64: 2>, scalar_prefetch = 0 : i64, scratch_operands = 0 : i64, tpu.core_type = #tpu.core_type<tc>, window_params = [{transform_indices = @transform_0, window_bounds = array<i64: 8, 32>}, {transform_indices = @transform_1, window_bounds = array<i64: 8, 1>}, {transform_indices = @transform_2, window_bounds = array<i64: 1, 128>}]} {
    %c0 = arith.constant 0 : index
    %c0_0 = arith.constant 0 : index
    %0 = vector.load %arg1[%c0, %c0_0] : memref<8x32xf32, #tpu.memory_space<vmem>>, vector<8x32xf32>
    %c0_1 = arith.constant 0 : index
    %c0_2 = arith.constant 0 : index
    %1 = vector.load %arg2[%c0_1, %c0_2] : memref<8x1xi32, #tpu.memory_space<vmem>>, vector<8x1xi32>
    %cst = arith.constant dense<0xFF800000> : vector<8xf32>
    %2 = vector.multi_reduction <maximumf>, %0, %cst [1] : vector<8x32xf32> to vector<8xf32>
    %3 = vector.shape_cast %2 : vector<8xf32> to vector<8x1xf32>
    %4 = vector.broadcast %3 : vector<8x1xf32> to vector<8x32xf32>
    %5 = arith.subf %0, %4 : vector<8x32xf32>
    %6 = math.exp %5 : vector<8x32xf32>
    %cst_3 = arith.constant dense<0.000000e+00> : vector<8xf32>
    %7 = vector.multi_reduction <add>, %6, %cst_3 [1] : vector<8x32xf32> to vector<8xf32>
    %8 = vector.shape_cast %7 : vector<8xf32> to vector<8x1xf32>
    %9 = math.log %8 : vector<8x1xf32>
    %10 = tpu.iota {dimensions = array<i32: 1>} : vector<1x32xi32>
    %11 = vector.broadcast %10 : vector<1x32xi32> to vector<8x32xi32>
    %12 = vector.broadcast %1 : vector<8x1xi32> to vector<8x32xi32>
    %13 = arith.cmpi eq, %11, %12 : vector<8x32xi32>
    %cst_4 = arith.constant 0.899999976 : f32
    %cst_5 = arith.constant 0.000000e+00 : f32
    %14 = vector.broadcast %cst_4 : f32 to vector<8x32xf32>
    %15 = vector.broadcast %cst_5 : f32 to vector<8x32xf32>
    %16 = arith.select %13, %14, %15 : vector<8x32xi1>, vector<8x32xf32>
    %cst_6 = arith.constant 3.125000e-03 : f32
    %17 = vector.broadcast %cst_6 : f32 to vector<8x32xf32>
    %18 = arith.addf %17, %16 : vector<8x32xf32>
    %19 = arith.mulf %18, %0 : vector<8x32xf32>
    %cst_7 = arith.constant dense<0.000000e+00> : vector<8xf32>
    %20 = vector.multi_reduction <add>, %19, %cst_7 [1] : vector<8x32xf32> to vector<8xf32>
    %21 = vector.shape_cast %20 : vector<8xf32> to vector<8x1xf32>
    %22 = arith.addf %3, %9 : vector<8x1xf32>
    %23 = arith.subf %22, %21 : vector<8x1xf32>
    %c8_i32 = arith.constant 8 : i32
    %24 = arith.muli %arg0, %c8_i32 : i32
    %25 = tpu.iota {dimensions = array<i32: 0>} : vector<8x1xi32>
    %26 = vector.broadcast %24 : i32 to vector<8x1xi32>
    %27 = arith.addi %26, %25 : vector<8x1xi32>
    %c16_i32 = arith.constant 16 : i32
    %28 = vector.broadcast %c16_i32 : i32 to vector<8x1xi32>
    %29 = arith.cmpi slt, %27, %28 : vector<8x1xi32>
    %cst_8 = arith.constant 0.000000e+00 : f32
    %30 = vector.broadcast %cst_8 : f32 to vector<8x1xf32>
    %31 = arith.select %29, %23, %30 : vector<8x1xi1>, vector<8x1xf32>
    %32 = vector.shape_cast %31 : vector<8x1xf32> to vector<1x8x1xf32>
    %cst_9 = arith.constant dense<0.000000e+00> : vector<1xf32>
    %33 = vector.multi_reduction <add>, %32, %cst_9 [1, 2] : vector<1x8x1xf32> to vector<1xf32>
    %34 = vector.shape_cast %33 : vector<1xf32> to vector<1x1x1xf32>
    %35 = vector.extract %34[0, 0, 0] : f32 from vector<1x1x1xf32>
    %36 = tpu.iota {dimensions = array<i32: 1>} : vector<1x128xi32>
    %c0_i32 = arith.constant 0 : i32
    %37 = vector.broadcast %c0_i32 : i32 to vector<1x128xi32>
    %38 = arith.cmpi eq, %36, %37 : vector<1x128xi32>
    %cst_10 = arith.constant 0.000000e+00 : f32
    %39 = vector.broadcast %35 : f32 to vector<1x128xf32>
    %40 = vector.broadcast %cst_10 : f32 to vector<1x128xf32>
    %41 = arith.select %38, %39, %40 : vector<1x128xi1>, vector<1x128xf32>
    %c0_11 = arith.constant 0 : index
    %c0_12 = arith.constant 0 : index
    %42 = vector.load %arg3[%c0_11, %c0_12] : memref<1x128xf32, #tpu.memory_space<vmem>>, vector<1x128xf32>
    tpu.vector_store %arg3[%c0_11, %c0_12], %41 {strides = array<i32>} : memref<1x128xf32, #tpu.memory_space<vmem>>, vector<1x128xf32>,
    return
  }
  func.func @transform_0(%arg0: i32) -> (i32, i32) {
    %c0_i32 = arith.constant 0 : i32
    %c0_i32_0 = arith.constant 0 : i32
    return %arg0, %c0_i32 : i32, i32
  }
  func.func @transform_1(%arg0: i32) -> (i32, i32) {
    %c0_i32 = arith.constant 0 : i32
    %c0_i32_0 = arith.constant 0 : i32
    return %arg0, %c0_i32 : i32, i32
  }
  func.func @transform_2(%arg0: i32) -> (i32, i32) {
    %c0_i32 = arith.constant 0 : i32
    %c0_i32_0 = arith.constant 0 : i32
    return %c0_i32, %arg0 : i32, i32
  }
}

</mosaic_0001>

<llo_original>
// kernel: tpu_custom_call.1
$region0: #{tpu_custom_call.1}
  #allocation0 [shape = 'u32[]', space=smem, size = 0x4, offset = 0x4, fixed_abs, tag = 'smem constant byte address 0x4 - core index']
  #allocation1 [shape = 'u32[144,128]{1,0:T(1,128)}', space=vmem, size = 0x12000, scoped, tag = 'internal scratch']
  %s0 = inlined_call_operand.vmem [shape: f32[16,32], index: 0, kind: input, shape index: {}]
  %s1 = inlined_call_operand.vmem [shape: s32[16,1], index: 1, kind: input, shape index: {}]
  %s2 = inlined_call_operand.hbm [shape: f32[1,256], index: 2, kind: output, shape index: {}]
  %s3 = sld [smem:[#allocation0]]
  $region41: #{tpu_custom_call.1} parent=0
    _
  %s5 = ssub.s32 1, %s3
  %s6 = scalar_select 0, %s5, %s3
  $region1: #{tpu_custom_call.1} parent=0
    #allocation2 [shape = 'u8[1024]{0}', space=vmem, size = 0x400, scoped, tag = 'output window, operand 0']
    #allocation3 [shape = 's32[2]{0}', space=sflag, size = 0x8, scoped, tag = 'scoped memory for tpu_custom_call.1']
    %7 = vsyncpa [#allocation3], 0
    %s8 = scalar_lea.sflag [#allocation3], 1
    %9 = vsyncpa %s8, 0
    loop: start=0, step=1, limit=4
    $region2: #{tpu_custom_call.1} parent=1 // loop_pre_header
      _
    $region3: #{tpu_custom_call.1} parent=1 // loop_header
      %s11 = sphi 0, %s15
      %p12 = scmp.ge.s32.totalorder %s11, 4
      %s21 = sphi 0, %s23
      %s24 = sphi 0, %s21
      %s25 = sphi 0, %s24
      %s41 = sphi 0, %s25
      %s47 = sphi 0, %s49
      %s50 = sphi 0, %s47
      %s51 = sphi 0, %s50
      %s67 = sphi 0, %s51
      %s73 = sphi 0, %s75
      %s76 = sphi 0, %s73
      %s77 = sphi 0, %s76
      %s93 = sphi 0, %s77
    $region4: #{tpu_custom_call.1} parent=1 // loop_header_branch
      %14 = sbr.rel (%p12) target = $region8
    $region5: #{tpu_custom_call.1} parent=1 // loop_body
      %s16 = ssub.s32 %s11, 1
      %s17 = ssub.s32 %s11, 2
      %s18 = sadd.s32 %s11, 1
      %s19 = ssub.s32 %s11, %s18
      %p20 = scmp.eq.s32.totalorder %s19, 0
      %s22 = sadd.s32 %s21, 1
      %s23 = scalar_select %p20, %s21, %s22
      %p26 = pneg %p20
      %p27 = scmp.eq.s32.totalorder %s11, 1
      %p28 = por %p26, %p27
      %p29 = scmp.ne.s32.totalorder %s21, %s24
      %p30 = scmp.eq.s32.totalorder %s11, 0
      %p31 = por %p29, %p30
      %p32 = scmp.ne.s32.totalorder %s21, %s24
      %p33 = scmp.eq.s32.totalorder %s16, 1
      %p34 = por %p32, %p33
      %p35 = scmp.ne.s32.totalorder %s24, %s25
      %p36 = scmp.eq.s32.totalorder %s16, 0
      %p37 = por %p35, %p36
      %p38 = scmp.ne.s32.totalorder %s24, %s25
      %p39 = scmp.eq.s32.totalorder %s17, 1
      %p40 = por %p38, %p39
      %p42 = scmp.ne.s32.totalorder %s25, %s41
      %p43 = scmp.eq.s32.totalorder %s17, 0
      %p44 = por %p42, %p43
      %s45 = ssub.s32 %s11, %s18
      %p46 = scmp.eq.s32.totalorder %s45, 0
      %s48 = sadd.s32 %s47, 1
      %s49 = scalar_select %p46, %s47, %s48
      %p52 = pneg %p46
      %p53 = scmp.eq.s32.totalorder %s11, 1
      %p54 = por %p52, %p53
      %p55 = scmp.ne.s32.totalorder %s47, %s50
      %p56 = scmp.eq.s32.totalorder %s11, 0
      %p57 = por %p55, %p56
      %p58 = scmp.ne.s32.totalorder %s47, %s50
      %p59 = scmp.eq.s32.totalorder %s16, 1
      %p60 = por %p58, %p59
      %p61 = scmp.ne.s32.totalorder %s50, %s51
      %p62 = scmp.eq.s32.totalorder %s16, 0
      %p63 = por %p61, %p62
      %p64 = scmp.ne.s32.totalorder %s50, %s51
      %p65 = scmp.eq.s32.totalorder %s17, 1
      %p66 = por %p64, %p65
      %p68 = scmp.ne.s32.totalorder %s51, %s67
      %p69 = scmp.eq.s32.totalorder %s17, 0
      %p70 = por %p68, %p69
      %s71 = ssub.s32 %s11, %s18
      %p72 = scmp.eq.s32.totalorder %s71, 0
      %s74 = sadd.s32 %s73, 1
      %s75 = scalar_select %p72, %s73, %s74
      %p78 = pneg %p72
      %p79 = scmp.eq.s32.totalorder %s11, 1
      %p80 = por %p78, %p79
      %p81 = scmp.ne.s32.totalorder %s73, %s76
      %p82 = scmp.eq.s32.totalorder %s11, 0
      %p83 = por %p81, %p82
      %p84 = scmp.ne.s32.totalorder %s73, %s76
      %p85 = scmp.eq.s32.totalorder %s16, 1
      %p86 = por %p84, %p85
      %p87 = scmp.ne.s32.totalorder %s76, %s77
      %p88 = scmp.eq.s32.totalorder %s16, 0
      %p89 = por %p87, %p88
      %p90 = scmp.ne.s32.totalorder %s76, %s77
      %p91 = scmp.eq.s32.totalorder %s17, 1
      %p92 = por %p90, %p91
      %p94 = scmp.ne.s32.totalorder %s77, %s93
      %p95 = scmp.eq.s32.totalorder %s17, 0
      %p96 = por %p94, %p95
      %p97 = scmp.le.s32.totalorder 1, %s11
      %p98 = scmp.lt.s32.totalorder %s11, 3
      %p99 = pnand %p97, %p98
      %p100 = pneg %p99
      // Predicated region
      $region9: #{tpu_custom_call.1} parent=5 // pred_check
        _
      $region10: #{tpu_custom_call.1} parent=5 // pred_check_branch
        %102 = sbr.rel (%p99) target = $region12
      $region11: #{tpu_custom_call.1} parent=5 // pred_region
        %s103 = ssub.s32 %s11, 1
      $region12: #{tpu_custom_call.1} parent=5 // pred_fallthru
        _
      %p104 = scmp.lt.s32.totalorder %s11, 2
      // Predicated region
      $region13: #{tpu_custom_call.1} parent=5 // pred_check
        %p105 = pneg %p104
      $region14: #{tpu_custom_call.1} parent=5 // pred_check_branch
        %107 = sbr.rel (%p105) target = $region16
      $region15: #{tpu_custom_call.1} parent=5 // pred_region
        // Predicated region
        $region17: #{tpu_custom_call.1} parent=15 // pred_check
          %p108 = pneg %p31
        $region18: #{tpu_custom_call.1} parent=15 // pred_check_branch
          %110 = sbr.rel (%p108) target = $region20
        $region19: #{tpu_custom_call.1} parent=15 // pred_region
          %p111 = scmp.lt.s32.totalorder %s11, 1
          %s112 = scalar_select %p111, %s11, 1
          %s113 = smul.addr %s112, 8
          %s114 = scalar_lea.vmem %s0, %s113
        $region20: #{tpu_custom_call.1} parent=15 // pred_fallthru
          _
        // Predicated region
        $region21: #{tpu_custom_call.1} parent=15 // pred_check
          %p115 = pneg %p57
        $region22: #{tpu_custom_call.1} parent=15 // pred_check_branch
          %117 = sbr.rel (%p115) target = $region24
        $region23: #{tpu_custom_call.1} parent=15 // pred_region
          %p118 = scmp.lt.s32.totalorder %s11, 1
          %s119 = scalar_select %p118, %s11, 1
          %s120 = smul.addr %s119, 8
          %s121 = scalar_lea.vmem %s1, %s120
        $region24: #{tpu_custom_call.1} parent=15 // pred_fallthru
          _
      $region16: #{tpu_custom_call.1} parent=5 // pred_fallthru
        _
      %p122 = scmp.le.s32.totalorder 1, %s11
      %p123 = scmp.lt.s32.totalorder %s11, 3
      %p124 = pnand %p122, %p123
      %p125 = pneg %p124
      // Predicated region
      $region25: #{tpu_custom_call.1} parent=5 // pred_check
        _
      $region26: #{tpu_custom_call.1} parent=5 // pred_check_branch
        %127 = sbr.rel (%p124) target = $region28
      $region27: #{tpu_custom_call.1} parent=5 // pred_region
        %s128 = ssub.s32 %s11, 1
        %p129 = scmp.lt.s32.totalorder %s16, 1
        %s130 = scalar_select %p129, %s16, 1
        %s131 = smul.addr %s130, 8
        %s132 = scalar_lea.vmem %s0, %s131
        %p133 = pneg %p37
        %p134 = pneg %p34
        %p135 = scmp.lt.s32.totalorder %s16, 1
        %s136 = scalar_select %p135, %s16, 1
        %s137 = smul.addr %s136, 8
        %s138 = scalar_lea.vmem %s1, %s137
        %p139 = pneg %p63
        %p140 = pneg %p60
        %p141 = pneg %p89
        %p142 = pneg %p86
        %s143 = sand.u32 %s76, 1
        %s144 = scalar_lea.sflag [#allocation3], %s143
        %s145 = sand.u32 %s76, 1
        %s146 = scalar_lea.vmem [#allocation2], %s145
        %p147 = scmp.lt.s32.totalorder %s16, 1
        %s148 = scalar_select %p147, %s16, 1
        %s149 = smul.addr %s148, 8
        %s150 = scalar_lea.vmem %s0, %s149
        %p151 = scmp.lt.s32.totalorder %s16, 1
        %s152 = scalar_select %p151, %s16, 1
        %s153 = smul.addr %s152, 8
        %s154 = scalar_lea.vmem %s1, %s153
        %v155 = vld [vmem:[%s150] sm:$0xff]
        %v156 = vld [vmem:[%s154] sm:$0xff]
        %vm157 = vcmask 261120
        %v158 = vsel %vm157, %v155, -inf
        %159 = vmax.xlane.f32.xlu0 %v158
        %v160 = vpop.xlane.xlu0 %159
        %v161 = vsub.f32 %v155, %v160
        %v162 = vmul.f32 %v161, 1.442695
        %v163 = vpow.pop %v162
        %v164 = vsel %vm157, %v163, 0.0
        %165 = vadd.xlane.f32.xlu0 %v164
        %v166 = vpop.xlane.xlu0 %165
        %v167 = vlog2.pop %v166
        %v168 = vmul.f32 %v167, 0.6931472
        %v169 = vlaneseq
        %v170 = vand.u32 %v169, 127
        %171 = vset.pattern.permute.xlu0 0
        %172 = vperm.xlu0 %171, %v156
        %v173 = vpop.permute.xlu0 %172
        %vm174 = vcmp.eq.s32.totalorder %v170, %v173
        %v175 = vsel %vm174, 0.9, 0.0
        %v176 = vadd.f32 %v175, 0.003125
        %v177 = vmul.f32 %v176, %v155
        %v178 = vsel %vm157, %v177, 0.0
        %179 = vadd.xlane.f32.xlu0 %v178
        %v180 = vpop.xlane.xlu0 %179
        %v181 = vadd.f32 %v160, %v168
        %v182 = vsub.f32 %v181, %v180
        %s183 = smul.u32 %s16, 8
        %v184 = vlaneseq
        %v185 = vshrl.u32 %v184, 7
        %v186 = vstv %s183
        %v187 = vadd.s32 %v186, %v185
        %vm188 = vcmp.lt.s32.totalorder %v187, 16
        %v189 = vsel %vm188, %v182, 0.0
        %vm190 = vcmask 7168
        %v191 = vsel %vm190, %v189, 0.0
        %192 = vadd.xlane.f32.xlu0 %v191
        %v193 = vpop.xlane.xlu0 %192
        %v194 = vrot.slane %v193, 4
        %v195 = vadd.f32 %v193, %v194
        %v196 = vrot.slane %v195, 2
        %v197 = vadd.f32 %v195, %v196
        %v198 = vrot.slane %v197, 1
        %v199 = vadd.f32 %v197, %v198
        %s200 = vtos %v199
        %vm201 = vcmp.eq.s32.totalorder %v170, 0
        %v202 = vstv %s200
        %v203 = vsel %vm201, %v202, 0.0
        %204 = vst [vmem:[%s146] sm:$0x1] %v203
        %s205 = sand.u32 %s76, 1
        %s206 = scalar_lea.sflag [#allocation3], %s205
        %s207 = sand.u32 %s76, 1
        %s208 = scalar_lea.vmem [#allocation2], %s207
        // Predicated region
        $region29: #{tpu_custom_call.1} parent=27 // pred_check
          %p209 = pneg %p86
        $region30: #{tpu_custom_call.1} parent=27 // pred_check_branch
          %211 = sbr.rel (%p209) target = $region32
        $region31: #{tpu_custom_call.1} parent=27 // pred_region
          %s213 = ssub.s32 16, 16
          %214 = vsyncadd %s206, %s213
          %s215 = smul.addr %s16, 16
          %s216 = scalar_lea.hbm %s2, %s215
          %s218 = sshll.u32 %s208, 4
          %s219 = int_to_ptr.vmem [resolvable:$true] %s218
          %221 = dma.vmem_to_hbm [thread:$0]  %s219, 16, %s216, %s206
        $region32: #{tpu_custom_call.1} parent=27 // pred_fallthru
          _
      $region28: #{tpu_custom_call.1} parent=5 // pred_fallthru
        _
      %p222 = scmp.le.s32.totalorder 2, %s11
      // Predicated region
      $region33: #{tpu_custom_call.1} parent=5 // pred_check
        %p223 = pneg %p222
      $region34: #{tpu_custom_call.1} parent=5 // pred_check_branch
        %225 = sbr.rel (%p223) target = $region36
      $region35: #{tpu_custom_call.1} parent=5 // pred_region
        %s226 = ssub.s32 %s11, 2
        // Predicated region
        $region37: #{tpu_custom_call.1} parent=35 // pred_check
          %p227 = pneg %p92
        $region38: #{tpu_custom_call.1} parent=35 // pred_check_branch
          %229 = sbr.rel (%p227) target = $region40
        $region39: #{tpu_custom_call.1} parent=35 // pred_region
          %s230 = sand.u32 %s77, 1
          %s231 = scalar_lea.sflag [#allocation3], %s230
          %s232 = sand.u32 %s77, 1
          %s233 = scalar_lea.vmem [#allocation2], %s232
          %234 = dma.done %s231, 16
        $region40: #{tpu_custom_call.1} parent=35 // pred_fallthru
          _
      $region36: #{tpu_custom_call.1} parent=5 // pred_fallthru
        _
    $region6: #{tpu_custom_call.1} parent=1 // loop_footer
      %s15 = sadd.s32 1, %s11
    $region7: #{tpu_custom_call.1} parent=1 // loop_footer_branch
      %10 = sbr.rel target = $region3
    $region8: #{tpu_custom_call.1} parent=1 // loop_exit
      _
    %235 = vsyncpa [#allocation3], 1
    %s236 = scalar_lea.sflag [#allocation3], 1
    %237 = vsyncpa %s236, 1

</llo_original>
